<compile_context>
chip_gen: v7x
topology: tpu7x:2x2x1
jax: 0.10.0
libtpu: 0.0.40
codegen_flags: <defaults>
</compile_context>

<pallas_src>
import jax
import jax.numpy as jnp
from jax.experimental import pallas as pl
from jax.experimental.pallas import tpu as pltpu

NUM_OBS = 4        # env.observation_space.shape[0] for CartPole-v0
NUM_ACTIONS = 2    # env.action_space.n for CartPole-v0
HIDDEN = 256
OUT_PAD = 8        # NUM_ACTIONS padded to a sublane-friendly width (HBM-visible)


def _mlp_kernel(x_ref, w1_ref, b1_ref, w2_ref, b2_ref, o_ref):
    x = x_ref[...]                                   # (tb, NUM_OBS) f32
    w1 = w1_ref[...]                                 # (NUM_OBS, HIDDEN) f32

    # fc1 on the VPU: K=4 is far too small for the MXU, so accumulate four
    # broadcast multiply-adds of (tb,1) * (1,HIDDEN) tiles.
    h = x[:, 0:1] * w1[0:1, :] + b1_ref[...]         # (tb, HIDDEN)
    for k in range(1, NUM_OBS):                      # unrolled at trace time
        h = h + x[:, k:k + 1] * w1[k:k + 1, :]
    h = jnp.maximum(h, 0.0)                          # ReLU (f32 VPU)

    # fc2: (tb,256) x (256,8) MXU matmul (columns >= NUM_ACTIONS of w2/b2 are
    # zero padding; MXU pads lanes internally).  Narrow 8-lane store keeps the
    # HBM writeback ~16x smaller than a 128-lane padded slab.
    y = jnp.dot(h, w2_ref[...], preferred_element_type=jnp.float32)
    o_ref[...] = (y + b2_ref[...]).astype(o_ref.dtype)


def prepare_params(w1, b1, w2, b2):
    """Build kernel-ready (padded / 2-D) parameters ONCE; reuse every call."""
    b1_2d = b1.reshape(1, HIDDEN)
    w2_pad = jnp.zeros((HIDDEN, OUT_PAD), w2.dtype).at[:, :NUM_ACTIONS].set(w2)
    b2_pad = jnp.zeros((1, OUT_PAD), b2.dtype).at[0, :NUM_ACTIONS].set(b2)
    return w1, b1_2d, w2_pad, b2_pad


def _choose_tile(B, tile_b):
    """Tile size: multiple of 8, <= tile_b, and small enough that the grid has
    at least 2 steps (so the 'parallel' axis actually splits across the two
    v7x TensorCores; harmless no-op on single-TC v5e/v6e)."""
    half = -(-B // 2)                       # ceil(B / 2)
    half = ((half + 7) // 8) * 8            # round up to sublane multiple
    return max(8, min(tile_b, half))


def net_forward(x, params, *, tile_b=2048, small_batch=1024):
    """x: (B, NUM_OBS) f32; params = prepare_params(w1, b1, w2, b2).
       Returns (B, NUM_ACTIONS) f32."""
    w1, b1_2d, w2_pad, b2_pad = params
    B = x.shape[0]

    if B <= small_batch:
        # Genuinely small batch: gridless call, whole problem in one VMEM tile
        # (no size-1 grid / pipelining overhead).
        out = pl.pallas_call(
            _mlp_kernel,
            out_shape=jax.ShapeDtypeStruct((B, OUT_PAD), jnp.float32),
            in_specs=[pl.BlockSpec(memory_space=pltpu.MemorySpace.VMEM)] * 5,
            out_specs=pl.BlockSpec(memory_space=pltpu.MemorySpace.VMEM),
        )(x, w1, b1_2d, w2_pad, b2_pad)
        return out[:, :NUM_ACTIONS]

    # Large batch: pipelined, megacore-parallel batch grid.  Pad B up to a
    # tile multiple so every block is full-size (no ragged masking, no giant
    # single-tile fallback); weights/biases use constant block indices so
    # they stay resident in VMEM across grid steps.
    tb = _choose_tile(B, tile_b)
    n_blocks = pl.cdiv(B, tb)
    B_pad = n_blocks * tb
    if B_pad != B:
        x = jnp.pad(x, ((0, B_pad - B), (0, 0)))

    out = pl.pallas_call(
        _mlp_kernel,
        out_shape=jax.ShapeDtypeStruct((B_pad, OUT_PAD), jnp.float32),
        grid=(n_blocks,),
        in_specs=[
            pl.BlockSpec((tb, NUM_OBS), lambda i: (i, 0)),
            pl.BlockSpec((NUM_OBS, HIDDEN), lambda i: (0, 0)),
            pl.BlockSpec((1, HIDDEN), lambda i: (0, 0)),
            pl.BlockSpec((HIDDEN, OUT_PAD), lambda i: (0, 0)),
            pl.BlockSpec((1, OUT_PAD), lambda i: (0, 0)),
        ],
        out_specs=pl.BlockSpec((tb, OUT_PAD), lambda i: (i, 0)),
        compiler_params=pltpu.CompilerParams(
            dimension_semantics=("parallel",),
        ),
    )(x, w1, b1_2d, w2_pad, b2_pad)

    return out[:B, :NUM_ACTIONS]


def init_params(key):
    """Deterministic parameter init (Kaiming-uniform-ish, like nn.Linear defaults)."""
    k1, k2, k3, k4 = jax.random.split(key, 4)
    bound1 = 1.0 / (NUM_OBS ** 0.5)
    bound2 = 1.0 / (HIDDEN ** 0.5)
    w1 = jax.random.uniform(k1, (NUM_OBS, HIDDEN), jnp.float32, -bound1, bound1)
    b1 = jax.random.uniform(k2, (HIDDEN,), jnp.float32, -bound1, bound1)
    w2 = jax.random.uniform(k3, (HIDDEN, NUM_ACTIONS), jnp.float32, -bound2, bound2)
    b2 = jax.random.uniform(k4, (NUM_ACTIONS,), jnp.float32, -bound2, bound2)
    return w1, b1, w2, b2


def _reference(x, w1, b1, w2, b2):
    return jnp.maximum(x @ w1 + b1, 0.0) @ w2 + b2


if __name__ == "__main__":
    key = jax.random.PRNGKey(0)
    kx, kp, kx2 = jax.random.split(key, 3)
    w1, b1, w2, b2 = init_params(kp)
    params = prepare_params(w1, b1, w2, b2)   # padded params built once

    # Small batch (gridless path), matching a handful of CartPole observations.
    B = 8
    x = jax.random.normal(kx, (B, NUM_OBS), jnp.float32)
    out = jax.block_until_ready(net_forward(x, params))
    ref = _reference(x, w1, b1, w2, b2)
    assert out.shape == (B, NUM_ACTIONS)
    assert jnp.allclose(out, ref, atol=1e-4, rtol=1e-4)

    # Larger, non-tile-multiple batch exercises the padded, 2-step "parallel"
    # gridded path (>= 2 blocks so v7x megacore sharding is exercised too).
    B2 = 2056
    x2 = jax.random.normal(kx2, (B2, NUM_OBS), jnp.float32)
    out2 = jax.block_until_ready(net_forward(x2, params))
    ref2 = _reference(x2, w1, b1, w2, b2)
    assert out2.shape == (B2, NUM_ACTIONS)
    assert jnp.allclose(out2, ref2, atol=1e-4, rtol=1e-4)

    print("KERNEL_OK")
</pallas_src>

<mosaic_0001>
module attributes {stable_mosaic.version = 11 : i64} {
  func.func @_mlp_kernel(%arg0: memref<8x4xf32, #tpu.memory_space<vmem>>, %arg1: memref<4x256xf32, #tpu.memory_space<vmem>>, %arg2: memref<1x256xf32, #tpu.memory_space<vmem>>, %arg3: memref<256x8xf32, #tpu.memory_space<vmem>>, %arg4: memref<1x8xf32, #tpu.memory_space<vmem>>, %arg5: memref<8x8xf32, #tpu.memory_space<vmem>>) attributes {dimension_semantics = [], scalar_prefetch = 0 : i64, scratch_operands = 0 : i64, tpu.core_type = #tpu.core_type<tc>} {
    %c0 = arith.constant 0 : index
    %c0_0 = arith.constant 0 : index
    %0 = vector.load %arg0[%c0, %c0_0] : memref<8x4xf32, #tpu.memory_space<vmem>>, vector<8x4xf32>
    %c0_1 = arith.constant 0 : index
    %c0_2 = arith.constant 0 : index
    %1 = vector.load %arg1[%c0_1, %c0_2] : memref<4x256xf32, #tpu.memory_space<vmem>>, vector<4x256xf32>
    %2 = vector.extract_strided_slice %0 {offsets = [0, 0], sizes = [8, 1], strides = [1, 1]} : vector<8x4xf32> to vector<8x1xf32>
    %3 = vector.extract_strided_slice %1 {offsets = [0, 0], sizes = [1, 256], strides = [1, 1]} : vector<4x256xf32> to vector<1x256xf32>
    %4 = vector.broadcast %2 : vector<8x1xf32> to vector<8x256xf32>
    %5 = vector.broadcast %3 : vector<1x256xf32> to vector<8x256xf32>
    %6 = arith.mulf %4, %5 : vector<8x256xf32>
    %c0_3 = arith.constant 0 : index
    %c0_4 = arith.constant 0 : index
    %7 = vector.load %arg2[%c0_3, %c0_4] : memref<1x256xf32, #tpu.memory_space<vmem>>, vector<1x256xf32>
    %8 = vector.broadcast %7 : vector<1x256xf32> to vector<8x256xf32>
    %9 = arith.addf %6, %8 : vector<8x256xf32>
    %10 = vector.extract_strided_slice %0 {offsets = [0, 1], sizes = [8, 1], strides = [1, 1]} : vector<8x4xf32> to vector<8x1xf32>
    %11 = vector.extract_strided_slice %1 {offsets = [1, 0], sizes = [1, 256], strides = [1, 1]} : vector<4x256xf32> to vector<1x256xf32>
    %12 = vector.broadcast %10 : vector<8x1xf32> to vector<8x256xf32>
    %13 = vector.broadcast %11 : vector<1x256xf32> to vector<8x256xf32>
    %14 = arith.mulf %12, %13 : vector<8x256xf32>
    %15 = arith.addf %9, %14 : vector<8x256xf32>
    %16 = vector.extract_strided_slice %0 {offsets = [0, 2], sizes = [8, 1], strides = [1, 1]} : vector<8x4xf32> to vector<8x1xf32>
    %17 = vector.extract_strided_slice %1 {offsets = [2, 0], sizes = [1, 256], strides = [1, 1]} : vector<4x256xf32> to vector<1x256xf32>
    %18 = vector.broadcast %16 : vector<8x1xf32> to vector<8x256xf32>
    %19 = vector.broadcast %17 : vector<1x256xf32> to vector<8x256xf32>
    %20 = arith.mulf %18, %19 : vector<8x256xf32>
    %21 = arith.addf %15, %20 : vector<8x256xf32>
    %22 = vector.extract_strided_slice %0 {offsets = [0, 3], sizes = [8, 1], strides = [1, 1]} : vector<8x4xf32> to vector<8x1xf32>
    %23 = vector.extract_strided_slice %1 {offsets = [3, 0], sizes = [1, 256], strides = [1, 1]} : vector<4x256xf32> to vector<1x256xf32>
    %24 = vector.broadcast %22 : vector<8x1xf32> to vector<8x256xf32>
    %25 = vector.broadcast %23 : vector<1x256xf32> to vector<8x256xf32>
    %26 = arith.mulf %24, %25 : vector<8x256xf32>
    %27 = arith.addf %21, %26 : vector<8x256xf32>
    %cst = arith.constant 0.000000e+00 : f32
    %28 = vector.broadcast %cst : f32 to vector<8x256xf32>
    %29 = arith.maximumf %27, %28 : vector<8x256xf32>
    %c0_5 = arith.constant 0 : index
    %c0_6 = arith.constant 0 : index
    %30 = vector.load %arg3[%c0_5, %c0_6] : memref<256x8xf32, #tpu.memory_space<vmem>>, vector<256x8xf32>
    %cst_7 = arith.constant dense<0.000000e+00> : vector<8x8xf32>
    %31 = tpu.matmul %29, %30, %cst_7 {dimension_numbers = #tpu.dot_dimension_numbers<[1], [0], [0], [1], [0, 0, 1, 1], [], []>} : vector<8x256xf32>, vector<256x8xf32>, vector<8x8xf32> -> vector<8x8xf32>
    %c0_8 = arith.constant 0 : index
    %c0_9 = arith.constant 0 : index
    %32 = vector.load %arg4[%c0_8, %c0_9] : memref<1x8xf32, #tpu.memory_space<vmem>>, vector<1x8xf32>
    %33 = vector.broadcast %32 : vector<1x8xf32> to vector<8x8xf32>
    %34 = arith.addf %31, %33 : vector<8x8xf32>
    %c0_10 = arith.constant 0 : index
    %c0_11 = arith.constant 0 : index
    %35 = vector.load %arg5[%c0_10, %c0_11] : memref<8x8xf32, #tpu.memory_space<vmem>>, vector<8x8xf32>
    tpu.vector_store %arg5[%c0_10, %c0_11], %34 {strides = array<i32>} : memref<8x8xf32, #tpu.memory_space<vmem>>, vector<8x8xf32>,
    return
  }
}

</mosaic_0001>

<llo_original>
// kernel: tpu_custom_call.1
$region0: #{tpu_custom_call.1}
  #allocation0 [shape = 'u32[]', space=smem, size = 0x4, offset = 0x4, fixed_abs, tag = 'smem constant byte address 0x4 - core index']
  #allocation1 [shape = 'u32[144,128]{1,0:T(1,128)}', space=vmem, size = 0x12000, scoped, tag = 'internal scratch']
  %s0 = inlined_call_operand.vmem [shape: f32[8,4], index: 0, kind: input, shape index: {}]
  %s1 = inlined_call_operand.vmem [shape: f32[4,256], index: 1, kind: input, shape index: {}]
  %s2 = inlined_call_operand.vmem [shape: f32[1,256], index: 2, kind: input, shape index: {}]
  %s3 = inlined_call_operand.vmem [shape: f32[256,8], index: 3, kind: input, shape index: {}]
  %s4 = inlined_call_operand.vmem [shape: f32[1,8], index: 4, kind: input, shape index: {}]
  %s5 = inlined_call_operand.hbm [shape: f32[8,8], index: 5, kind: output, shape index: {}]
  %s6 = sld [smem:[#allocation0]]
  $region30: #{tpu_custom_call.1} parent=0
    _
  %s8 = ssub.s32 1, %s6
  %s9 = scalar_select 0, %s8, %s6
  $region1: #{tpu_custom_call.1} parent=0
    #allocation2 [shape = 'u8[4096]{0}', space=vmem, size = 0x1000, scoped, tag = 'output window, operand 0, single buffered']
    #allocation3 [shape = 's32[1]{0}', space=sflag, size = 0x4, scoped, tag = 'scoped memory for tpu_custom_call.1']
    %10 = vsyncpa [#allocation3], 0
    // Predicated region
    $region2: #{tpu_custom_call.1} parent=1 // pred_check
      _
    $region3: #{tpu_custom_call.1} parent=1 // pred_check_branch
      %12 = sbr.rel (0) target = $region5
    $region4: #{tpu_custom_call.1} parent=1 // pred_region
      _
    $region5: #{tpu_custom_call.1} parent=1 // pred_fallthru
      _
    // Predicated region
    $region6: #{tpu_custom_call.1} parent=1 // pred_check
      _
    $region7: #{tpu_custom_call.1} parent=1 // pred_check_branch
      %14 = sbr.rel (0) target = $region9
    $region8: #{tpu_custom_call.1} parent=1 // pred_region
      _
    $region9: #{tpu_custom_call.1} parent=1 // pred_fallthru
      _
    // Predicated region
    $region10: #{tpu_custom_call.1} parent=1 // pred_check
      _
    $region11: #{tpu_custom_call.1} parent=1 // pred_check_branch
      %16 = sbr.rel (0) target = $region13
    $region12: #{tpu_custom_call.1} parent=1 // pred_region
      _
    $region13: #{tpu_custom_call.1} parent=1 // pred_fallthru
      _
    // Predicated region
    $region14: #{tpu_custom_call.1} parent=1 // pred_check
      _
    $region15: #{tpu_custom_call.1} parent=1 // pred_check_branch
      %18 = sbr.rel (0) target = $region17
    $region16: #{tpu_custom_call.1} parent=1 // pred_region
      _
    $region17: #{tpu_custom_call.1} parent=1 // pred_fallthru
      _
    // Predicated region
    $region18: #{tpu_custom_call.1} parent=1 // pred_check
      _
    $region19: #{tpu_custom_call.1} parent=1 // pred_check_branch
      %20 = sbr.rel (0) target = $region21
    $region20: #{tpu_custom_call.1} parent=1 // pred_region
      _
    $region21: #{tpu_custom_call.1} parent=1 // pred_fallthru
      _
    %v21 = vld [vmem:[%s0] sm:$0xff]
    %v22 = vld [vmem:[%s1] sm:$0xff]
    %24 = vset.pattern.permute.xlu0 0
    %25 = vperm.xlu0 %24, %v21
    %v26 = vpop.permute.xlu0 %25
    %v29 = vlaneseq
    %v30 = vshrl.u32 %v29, 7
    %v31 = vsub.s32 0, %v30
    %v32 = vrot.slane %v22, %v31
    %v33 = vlaneseq
    %v34 = vshrl.u32 %v33, 7
    %v35 = vsub.s32 4, %v34
    %v36 = vrot.slane %v22, %v35
    %v39 = vlaneseq
    %v40 = vshrl.u32 %v39, 7
    %v41 = vsub.s32 0, %v40
    %v42 = vrot.slane %v32, %v41
    %v43 = vlaneseq
    %v44 = vshrl.u32 %v43, 7
    %v45 = vsub.s32 0, %v44
    %v46 = vrot.slane %v36, %v45
    %v47 = vmul.f32 %v26, %v42
    %v48 = vmul.f32 %v26, %v46
    %v49 = vld [vmem:[%s2] sm:$0x3]
    %v51 = vlaneseq
    %v52 = vshrl.u32 %v51, 7
    %v53 = vsub.s32 0, %v52
    %v54 = vrot.slane %v49, %v53
    %v55 = vlaneseq
    %v56 = vshrl.u32 %v55, 7
    %v57 = vsub.s32 1, %v56
    %v58 = vrot.slane %v49, %v57
    %v61 = vadd.f32 %v47, %v54
    %v62 = vadd.f32 %v48, %v58
    %63 = vset.pattern.permute.xlu0 1
    %64 = vperm.xlu0 %63, %v21
    %v65 = vpop.permute.xlu0 %64
    %v67 = vlaneseq
    %v68 = vshrl.u32 %v67, 7
    %v69 = vsub.s32 1, %v68
    %v70 = vrot.slane %v22, %v69
    %v71 = vlaneseq
    %v72 = vshrl.u32 %v71, 7
    %v73 = vsub.s32 5, %v72
    %v74 = vrot.slane %v22, %v73
    %v77 = vlaneseq
    %v78 = vshrl.u32 %v77, 7
    %v79 = vsub.s32 1, %v78
    %v80 = vrot.slane %v70, %v79
    %v81 = vlaneseq
    %v82 = vshrl.u32 %v81, 7
    %v83 = vsub.s32 1, %v82
    %v84 = vrot.slane %v74, %v83
    %v85 = vmul.f32 %v65, %v80
    %v86 = vmul.f32 %v65, %v84
    %v87 = vadd.f32 %v61, %v85
    %v88 = vadd.f32 %v62, %v86
    %89 = vset.pattern.permute.xlu0 2
    %90 = vperm.xlu0 %89, %v21
    %v91 = vpop.permute.xlu0 %90
    %v93 = vlaneseq
    %v94 = vshrl.u32 %v93, 7
    %v95 = vsub.s32 2, %v94
    %v96 = vrot.slane %v22, %v95
    %v97 = vlaneseq
    %v98 = vshrl.u32 %v97, 7
    %v99 = vsub.s32 6, %v98
    %v100 = vrot.slane %v22, %v99
    %v103 = vlaneseq
    %v104 = vshrl.u32 %v103, 7
    %v105 = vsub.s32 2, %v104
    %v106 = vrot.slane %v96, %v105
    %v107 = vlaneseq
    %v108 = vshrl.u32 %v107, 7
    %v109 = vsub.s32 2, %v108
    %v110 = vrot.slane %v100, %v109
    %v111 = vmul.f32 %v91, %v106
    %v112 = vmul.f32 %v91, %v110
    %v113 = vadd.f32 %v87, %v111
    %v114 = vadd.f32 %v88, %v112
    %115 = vset.pattern.permute.xlu0 3
    %116 = vperm.xlu0 %115, %v21
    %v117 = vpop.permute.xlu0 %116
    %v119 = vlaneseq
    %v120 = vshrl.u32 %v119, 7
    %v121 = vsub.s32 3, %v120
    %v122 = vrot.slane %v22, %v121
    %v123 = vlaneseq
    %v124 = vshrl.u32 %v123, 7
    %v125 = vsub.s32 7, %v124
    %v126 = vrot.slane %v22, %v125
    %v129 = vlaneseq
    %v130 = vshrl.u32 %v129, 7
    %v131 = vsub.s32 3, %v130
    %v132 = vrot.slane %v122, %v131
    %v133 = vlaneseq
    %v134 = vshrl.u32 %v133, 7
    %v135 = vsub.s32 3, %v134
    %v136 = vrot.slane %v126, %v135
    %v137 = vmul.f32 %v117, %v132
    %v138 = vmul.f32 %v117, %v136
    %v139 = vadd.f32 %v113, %v137
    %v140 = vadd.f32 %v114, %v138
    %v141 = vmax.f32 %v139, 0.0
    %v142 = vmax.f32 %v140, 0.0
    %v143 = vld [vmem:[%s3] sm:$0xff]
    %v144 = vld [vmem:[%s3 + $0x8] sm:$0xff]
    %v145 = vld [vmem:[%s3 + $0x10] sm:$0xff]
    %v146 = vld [vmem:[%s3 + $0x18] sm:$0xff]
    %v147 = vld [vmem:[%s3 + $0x20] sm:$0xff]
    %v148 = vld [vmem:[%s3 + $0x28] sm:$0xff]
    %v149 = vld [vmem:[%s3 + $0x30] sm:$0xff]
    %v150 = vld [vmem:[%s3 + $0x38] sm:$0xff]
    %v151 = vld [vmem:[%s3 + $0x40] sm:$0xff]
    %v152 = vld [vmem:[%s3 + $0x48] sm:$0xff]
    %v153 = vld [vmem:[%s3 + $0x50] sm:$0xff]
    %v154 = vld [vmem:[%s3 + $0x58] sm:$0xff]
    %v155 = vld [vmem:[%s3 + $0x60] sm:$0xff]
    %v156 = vld [vmem:[%s3 + $0x68] sm:$0xff]
    %v157 = vld [vmem:[%s3 + $0x70] sm:$0xff]
    %v158 = vld [vmem:[%s3 + $0x78] sm:$0xff]
    %v159 = vld [vmem:[%s3 + $0x80] sm:$0xff]
    %v160 = vld [vmem:[%s3 + $0x88] sm:$0xff]
    %v161 = vld [vmem:[%s3 + $0x90] sm:$0xff]
    %v162 = vld [vmem:[%s3 + $0x98] sm:$0xff]
    %v163 = vld [vmem:[%s3 + $0xa0] sm:$0xff]
    %v164 = vld [vmem:[%s3 + $0xa8] sm:$0xff]
    %v165 = vld [vmem:[%s3 + $0xb0] sm:$0xff]
    %v166 = vld [vmem:[%s3 + $0xb8] sm:$0xff]
    %v167 = vld [vmem:[%s3 + $0xc0] sm:$0xff]
    %v168 = vld [vmem:[%s3 + $0xc8] sm:$0xff]
    %v169 = vld [vmem:[%s3 + $0xd0] sm:$0xff]
    %v170 = vld [vmem:[%s3 + $0xd8] sm:$0xff]
    %v171 = vld [vmem:[%s3 + $0xe0] sm:$0xff]
    %v172 = vld [vmem:[%s3 + $0xe8] sm:$0xff]
    %v173 = vld [vmem:[%s3 + $0xf0] sm:$0xff]
    %v174 = vld [vmem:[%s3 + $0xf8] sm:$0xff]
    %v175 = vld [vmem:[%s4] sm:$0x1]
    %v177 = vlaneseq
    %v178 = vshrl.u32 %v177, 7
    %v179 = vsub.s32 0, %v178
    %v180 = vrot.slane %v175, %v179
    %182 = vmatprep.subr.mxu0 0.0
    %183 = vmatpush1.msra.mxu0 %v143
    %184 = vmatprep.subr.mxu0 0.0
    %185 = vmatpush1.msra.mxu0 %v144
    %186 = vmatprep.subr.mxu0 0.0
    %187 = vmatpush1.msra.mxu0 %v145
    %188 = vmatprep.subr.mxu0 0.0
    %189 = vmatpush1.msra.mxu0 %v146
    %190 = vmatprep.subr.mxu0 0.0
    %191 = vmatpush1.msra.mxu0 %v147
    %192 = vmatprep.subr.mxu0 0.0
    %193 = vmatpush1.msra.mxu0 %v148
    %194 = vmatprep.subr.mxu0 0.0
    %195 = vmatpush1.msra.mxu0 %v149
    %196 = vmatprep.subr.mxu0 0.0
    %197 = vmatpush1.msra.mxu0 %v150
    %198 = vmatprep.subr.mxu0 0.0
    %199 = vmatpush1.msra.mxu0 %v151
    %200 = vmatprep.subr.mxu0 0.0
    %201 = vmatpush1.msra.mxu0 %v152
    %202 = vmatprep.subr.mxu0 0.0
    %203 = vmatpush1.msra.mxu0 %v153
    %204 = vmatprep.subr.mxu0 0.0
    %205 = vmatpush1.msra.mxu0 %v154
    %206 = vmatprep.subr.mxu0 0.0
    %207 = vmatpush1.msra.mxu0 %v155
    %208 = vmatprep.subr.mxu0 0.0
    %209 = vmatpush1.msra.mxu0 %v156
    %210 = vmatprep.subr.mxu0 0.0
    %211 = vmatpush1.msra.mxu0 %v157
    %212 = vmatprep.subr.mxu0 0.0
    %213 = vmatpush1.msra.mxu0 %v158
    %214 = vmatprep.subr.mxu0 0.0
    %215 = vmatpush1.msra.mxu0 %v159
    %216 = vmatprep.subr.mxu0 0.0
    %217 = vmatpush1.msra.mxu0 %v160
    %218 = vmatprep.subr.mxu0 0.0
    %219 = vmatpush1.msra.mxu0 %v161
    %220 = vmatprep.subr.mxu0 0.0
    %221 = vmatpush1.msra.mxu0 %v162
    %222 = vmatprep.subr.mxu0 0.0
    %223 = vmatpush1.msra.mxu0 %v163
    %224 = vmatprep.subr.mxu0 0.0
    %225 = vmatpush1.msra.mxu0 %v164
    %226 = vmatprep.subr.mxu0 0.0
    %227 = vmatpush1.msra.mxu0 %v165
    %228 = vmatprep.subr.mxu0 0.0
    %229 = vmatpush1.msra.mxu0 %v166
    %230 = vmatprep.subr.mxu0 0.0
    %231 = vmatpush1.msra.mxu0 %v167
    %232 = vmatprep.subr.mxu0 0.0
    %233 = vmatpush1.msra.mxu0 %v168
    %234 = vmatprep.subr.mxu0 0.0
    %235 = vmatpush1.msra.mxu0 %v169
    %236 = vmatprep.subr.mxu0 0.0
    %237 = vmatpush1.msra.mxu0 %v170
    %238 = vmatprep.subr.mxu0 0.0
    %239 = vmatpush1.msra.mxu0 %v171
    %240 = vmatprep.subr.mxu0 0.0
    %241 = vmatpush1.msra.mxu0 %v172
    %242 = vmatprep.subr.mxu0 0.0
    %243 = vmatpush1.msra.mxu0 %v173
    %244 = vmatprep.subr.mxu0 0.0
    %245 = vmatpush1.msra.mxu0 %v174
    %246 = vmatprep.mubr.f32.mxu0 %v142
    %247 = vmatmul.mubr.f32.gmra.mrb[0].mxu0 %v141
    %v248 = vpop.f32.mrb[0].mxu0
    %v249 = vadd.f32 %v180, %v248
    %v250 = vpop.f32.mrb[0].mxu0
    %251 = vdwg.mxu0
    %vm252 = vcmask 64512
    %253 = vst.msk [vmem:[#allocation2] sm:$0xff] %vm252, %v249
    // Predicated region
    $region22: #{tpu_custom_call.1} parent=1 // pred_check
      _
    $region23: #{tpu_custom_call.1} parent=1 // pred_check_branch
      %255 = sbr.rel (0) target = $region25
    $region24: #{tpu_custom_call.1} parent=1 // pred_region
      %s257 = ssub.s32 128, 128
      %258 = vsyncadd [#allocation3], %s257
      %s260 = sshll.u32 [#allocation2], 4
      %s261 = int_to_ptr.vmem [resolvable:$true] %s260
      %263 = dma.vmem_to_hbm [thread:$0]  %s261, 128, %s5, [#allocation3]
    $region25: #{tpu_custom_call.1} parent=1 // pred_fallthru
      _
    // Predicated region
    $region26: #{tpu_custom_call.1} parent=1 // pred_check
      _
    $region27: #{tpu_custom_call.1} parent=1 // pred_check_branch
      %265 = sbr.rel (0) target = $region29
    $region28: #{tpu_custom_call.1} parent=1 // pred_region
      %266 = dma.done [#allocation3], 128
    $region29: #{tpu_custom_call.1} parent=1 // pred_fallthru
      _
    %267 = vsyncpa [#allocation3], 1

</llo_original>
